<compile_context>
chip_gen: v7x
topology: tpu7x:2x2x1
jax: 0.10.0
libtpu: 0.0.40
codegen_flags: <defaults>
</compile_context>

<pallas_src>
import functools

import jax
import jax.numpy as jnp
from jax import lax
from jax.experimental import pallas as pl
from jax.experimental.pallas import tpu as pltpu


def _mlp_kernel(x_ref, *refs, n_layers):
    """Fused MLP over one batch tile.

    Argument order (from pallas_call): x_ref, w0, b0, w1, b1, ..., out_ref.
    Activations/weights are cast to bf16 in-kernel; accumulation is f32.
    """
    out_ref = refs[-1]
    wb = refs[:-1]

    h = x_ref[...].astype(jnp.bfloat16)                   # [tile_b, in_dim]
    for l in range(n_layers):
        w = wb[2 * l][...].astype(jnp.bfloat16)           # [in_l, out_l]
        b = wb[2 * l + 1][...]                            # f32 [1, out_l]
        h = jnp.dot(h, w, preferred_element_type=jnp.float32) + b
        if l < n_layers - 1:
            h = jnp.maximum(h, 0.0).astype(jnp.bfloat16)  # fused ReLU + recast
    out_ref[...] = h.astype(out_ref.dtype)


def _pick_tile_b(B):
    if B >= 512:
        return 256            # fills MXU M on v6e, >=2 tiles per v7x core
    if B >= 128:
        return 128            # fills v5e MXU; one tile per v7x core at B=256
    return max(16, -(-B // 16) * 16)   # single padded tile, never < 16 rows


def mlp_forward(x, weights, biases, *, tile_b=None):
    """Run the MLP: x [B, input_dim] -> [B, output_dim] (f32).

    weights[l]: [in_l, out_l] (f32 or bf16; cast to bf16 in-kernel)
    biases[l]:  [out_l]       (used as f32)
    """
    B, in_dim = x.shape
    n_layers = len(weights)
    out_dim = weights[-1].shape[1]

    if tile_b is None:
        tile_b = _pick_tile_b(B)
    tile_b = max(8, (int(tile_b) // 8) * 8)   # sublane multiple

    grid = (pl.cdiv(B, tile_b),)

    # Biases as [1, out_l] f32 rows (negligible bytes; keeps layout 2-D).
    b2d = [b.reshape(1, -1).astype(jnp.float32) for b in biases]

    in_specs = [pl.BlockSpec((tile_b, in_dim), lambda i: (i, 0))]
    inputs = [x]
    for w, b in zip(weights, b2d):
        in_specs.append(pl.BlockSpec(w.shape, lambda i: (0, 0)))   # resident
        in_specs.append(pl.BlockSpec(b.shape, lambda i: (0, 0)))   # resident
        inputs.append(w)
        inputs.append(b)

    dims = [in_dim] + [w.shape[1] for w in weights]
    flops = 2 * B * sum(dims[l] * dims[l + 1] for l in range(n_layers))
    bytes_accessed = (
        x.size * x.dtype.itemsize
        + sum(w.size * w.dtype.itemsize for w in weights)
        + sum(b.size * 4 for b in b2d)
        + B * out_dim * 4
    )

    out = pl.pallas_call(
        functools.partial(_mlp_kernel, n_layers=n_layers),
        out_shape=jax.ShapeDtypeStruct((B, out_dim), jnp.float32),
        grid=grid,
        in_specs=in_specs,
        out_specs=pl.BlockSpec((tile_b, out_dim), lambda i: (i, 0)),
        compiler_params=pltpu.CompilerParams(
            dimension_semantics=("parallel",),
        ),
        cost_estimate=pl.CostEstimate(
            flops=flops, transcendentals=0, bytes_accessed=bytes_accessed),
    )(*inputs)

    return out


def reference_forward(x, weights, biases):
    """Pure-JAX f32 reference matching the PyTorch nn.Sequential forward."""
    h = x
    n_layers = len(weights)
    for l in range(n_layers):
        h = jnp.dot(h, weights[l], precision=lax.Precision.HIGHEST) + biases[l]
        if l < n_layers - 1:
            h = jnp.maximum(h, 0.0)
    return h


def init_params(key, input_dim, hidden_dims, output_dim):
    dims = [input_dim] + list(hidden_dims) + [output_dim]
    keys = jax.random.split(key, 2 * (len(dims) - 1))
    weights, biases = [], []
    for l in range(len(dims) - 1):
        in_d, out_d = dims[l], dims[l + 1]
        w = jax.random.normal(keys[2 * l], (in_d, out_d), jnp.float32) / jnp.sqrt(in_d)
        b = 0.02 * jax.random.normal(keys[2 * l + 1], (out_d,), jnp.float32)
        weights.append(w)
        biases.append(b)
    return weights, biases


if __name__ == "__main__":
    key = jax.random.PRNGKey(0)
    k_param, k_x = jax.random.split(key, 2)

    # Small shapes consistent with the module (flattened-weight embedder).
    # batch=4 < tile_b exercises the masked partial-block path (no wrapper pad).
    input_dim, hidden_dims, output_dim = 32, (64, 32), 16
    batch = 4

    weights, biases = init_params(k_param, input_dim, hidden_dims, output_dim)
    x = jax.random.normal(k_x, (batch, input_dim), jnp.float32)

    out = jax.block_until_ready(mlp_forward(x, weights, biases))

    ref = reference_forward(x, weights, biases)
    assert out.shape == (batch, output_dim)
    assert jnp.allclose(out, ref, atol=3e-2, rtol=3e-2), (
        f"max abs diff {jnp.max(jnp.abs(out - ref))}")

    print("KERNEL_OK")
</pallas_src>

<mosaic_0001>
module attributes {stable_mosaic.version = 11 : i64} {
  func.func @_mlp_kernel(%arg0: i32, %arg1: memref<16x32xf32, #tpu.memory_space<vmem>>, %arg2: memref<32x64xf32, #tpu.memory_space<vmem>>, %arg3: memref<1x64xf32, #tpu.memory_space<vmem>>, %arg4: memref<64x32xf32, #tpu.memory_space<vmem>>, %arg5: memref<1x32xf32, #tpu.memory_space<vmem>>, %arg6: memref<32x16xf32, #tpu.memory_space<vmem>>, %arg7: memref<1x16xf32, #tpu.memory_space<vmem>>, %arg8: memref<16x16xf32, #tpu.memory_space<vmem>>) attributes {dimension_semantics = [#tpu.dimension_semantics<parallel>], iteration_bounds = array<i64: 1>, scalar_prefetch = 0 : i64, scratch_operands = 0 : i64, tpu.core_type = #tpu.core_type<tc>, window_params = [{transform_indices = @transform_0, window_bounds = array<i64: 16, 32>}, {pipeline_mode = #tpu.pipeline_mode<synchronous>, transform_indices = @transform_1, window_bounds = array<i64: 32, 64>}, {pipeline_mode = #tpu.pipeline_mode<synchronous>, transform_indices = @transform_2, window_bounds = array<i64: 1, 64>}, {pipeline_mode = #tpu.pipeline_mode<synchronous>, transform_indices = @transform_3, window_bounds = array<i64: 64, 32>}, {pipeline_mode = #tpu.pipeline_mode<synchronous>, transform_indices = @transform_4, window_bounds = array<i64: 1, 32>}, {pipeline_mode = #tpu.pipeline_mode<synchronous>, transform_indices = @transform_5, window_bounds = array<i64: 32, 16>}, {pipeline_mode = #tpu.pipeline_mode<synchronous>, transform_indices = @transform_6, window_bounds = array<i64: 1, 16>}, {transform_indices = @transform_7, window_bounds = array<i64: 16, 16>}]} {
    %c0 = arith.constant 0 : index
    %c0_0 = arith.constant 0 : index
    %0 = vector.load %arg1[%c0, %c0_0] : memref<16x32xf32, #tpu.memory_space<vmem>>, vector<16x32xf32>
    %1 = arith.truncf %0 : vector<16x32xf32> to vector<16x32xbf16>
    %c0_1 = arith.constant 0 : index
    %c0_2 = arith.constant 0 : index
    %2 = vector.load %arg2[%c0_1, %c0_2] : memref<32x64xf32, #tpu.memory_space<vmem>>, vector<32x64xf32>
    %3 = arith.truncf %2 : vector<32x64xf32> to vector<32x64xbf16>
    %c0_3 = arith.constant 0 : index
    %c0_4 = arith.constant 0 : index
    %4 = vector.load %arg3[%c0_3, %c0_4] : memref<1x64xf32, #tpu.memory_space<vmem>>, vector<1x64xf32>
    %cst = arith.constant dense<0.000000e+00> : vector<16x64xf32>
    %5 = tpu.matmul %1, %3, %cst {dimension_numbers = #tpu.dot_dimension_numbers<[1], [0], [0], [1], [0, 0, 1, 1], [], []>} : vector<16x32xbf16>, vector<32x64xbf16>, vector<16x64xf32> -> vector<16x64xf32>
    %6 = vector.broadcast %4 : vector<1x64xf32> to vector<16x64xf32>
    %7 = arith.addf %5, %6 : vector<16x64xf32>
    %cst_5 = arith.constant 0.000000e+00 : f32
    %8 = vector.broadcast %cst_5 : f32 to vector<16x64xf32>
    %9 = arith.maximumf %7, %8 : vector<16x64xf32>
    %10 = arith.truncf %9 : vector<16x64xf32> to vector<16x64xbf16>
    %c0_6 = arith.constant 0 : index
    %c0_7 = arith.constant 0 : index
    %11 = vector.load %arg4[%c0_6, %c0_7] : memref<64x32xf32, #tpu.memory_space<vmem>>, vector<64x32xf32>
    %12 = arith.truncf %11 : vector<64x32xf32> to vector<64x32xbf16>
    %c0_8 = arith.constant 0 : index
    %c0_9 = arith.constant 0 : index
    %13 = vector.load %arg5[%c0_8, %c0_9] : memref<1x32xf32, #tpu.memory_space<vmem>>, vector<1x32xf32>
    %cst_10 = arith.constant dense<0.000000e+00> : vector<16x32xf32>
    %14 = tpu.matmul %10, %12, %cst_10 {dimension_numbers = #tpu.dot_dimension_numbers<[1], [0], [0], [1], [0, 0, 1, 1], [], []>} : vector<16x64xbf16>, vector<64x32xbf16>, vector<16x32xf32> -> vector<16x32xf32>
    %15 = vector.broadcast %13 : vector<1x32xf32> to vector<16x32xf32>
    %16 = arith.addf %14, %15 : vector<16x32xf32>
    %cst_11 = arith.constant 0.000000e+00 : f32
    %17 = vector.broadcast %cst_11 : f32 to vector<16x32xf32>
    %18 = arith.maximumf %16, %17 : vector<16x32xf32>
    %19 = arith.truncf %18 : vector<16x32xf32> to vector<16x32xbf16>
    %c0_12 = arith.constant 0 : index
    %c0_13 = arith.constant 0 : index
    %20 = vector.load %arg6[%c0_12, %c0_13] : memref<32x16xf32, #tpu.memory_space<vmem>>, vector<32x16xf32>
    %21 = arith.truncf %20 : vector<32x16xf32> to vector<32x16xbf16>
    %c0_14 = arith.constant 0 : index
    %c0_15 = arith.constant 0 : index
    %22 = vector.load %arg7[%c0_14, %c0_15] : memref<1x16xf32, #tpu.memory_space<vmem>>, vector<1x16xf32>
    %cst_16 = arith.constant dense<0.000000e+00> : vector<16x16xf32>
    %23 = tpu.matmul %19, %21, %cst_16 {dimension_numbers = #tpu.dot_dimension_numbers<[1], [0], [0], [1], [0, 0, 1, 1], [], []>} : vector<16x32xbf16>, vector<32x16xbf16>, vector<16x16xf32> -> vector<16x16xf32>
    %24 = vector.broadcast %22 : vector<1x16xf32> to vector<16x16xf32>
    %25 = arith.addf %23, %24 : vector<16x16xf32>
    %c0_17 = arith.constant 0 : index
    %c0_18 = arith.constant 0 : index
    %26 = vector.load %arg8[%c0_17, %c0_18] : memref<16x16xf32, #tpu.memory_space<vmem>>, vector<16x16xf32>
    tpu.vector_store %arg8[%c0_17, %c0_18], %25 {strides = array<i32>} : memref<16x16xf32, #tpu.memory_space<vmem>>, vector<16x16xf32>,
    return
  }
  func.func @transform_0(%arg0: i32) -> (i32, i32) {
    %c0_i32 = arith.constant 0 : i32
    %c0_i32_0 = arith.constant 0 : i32
    return %arg0, %c0_i32 : i32, i32
  }
  func.func @transform_1(%arg0: i32) -> (i32, i32) {
    %c0_i32 = arith.constant 0 : i32
    %c0_i32_0 = arith.constant 0 : i32
    %c0_i32_1 = arith.constant 0 : i32
    return %c0_i32, %c0_i32_0 : i32, i32
  }
  func.func @transform_2(%arg0: i32) -> (i32, i32) {
    %c0_i32 = arith.constant 0 : i32
    %c0_i32_0 = arith.constant 0 : i32
    %c0_i32_1 = arith.constant 0 : i32
    return %c0_i32, %c0_i32_0 : i32, i32
  }
  func.func @transform_3(%arg0: i32) -> (i32, i32) {
    %c0_i32 = arith.constant 0 : i32
    %c0_i32_0 = arith.constant 0 : i32
    %c0_i32_1 = arith.constant 0 : i32
    return %c0_i32, %c0_i32_0 : i32, i32
  }
  func.func @transform_4(%arg0: i32) -> (i32, i32) {
    %c0_i32 = arith.constant 0 : i32
    %c0_i32_0 = arith.constant 0 : i32
    %c0_i32_1 = arith.constant 0 : i32
    return %c0_i32, %c0_i32_0 : i32, i32
  }
  func.func @transform_5(%arg0: i32) -> (i32, i32) {
    %c0_i32 = arith.constant 0 : i32
    %c0_i32_0 = arith.constant 0 : i32
    %c0_i32_1 = arith.constant 0 : i32
    return %c0_i32, %c0_i32_0 : i32, i32
  }
  func.func @transform_6(%arg0: i32) -> (i32, i32) {
    %c0_i32 = arith.constant 0 : i32
    %c0_i32_0 = arith.constant 0 : i32
    %c0_i32_1 = arith.constant 0 : i32
    return %c0_i32, %c0_i32_0 : i32, i32
  }
  func.func @transform_7(%arg0: i32) -> (i32, i32) {
    %c0_i32 = arith.constant 0 : i32
    %c0_i32_0 = arith.constant 0 : i32
    return %arg0, %c0_i32 : i32, i32
  }
}

</mosaic_0001>

<llo_original>
// kernel: tpu_custom_call.1
$region0: #{tpu_custom_call.1}
  #allocation0 [shape = 'u32[]', space=smem, size = 0x4, offset = 0x4, fixed_abs, tag = 'smem constant byte address 0x4 - core index']
  #allocation1 [shape = 'u32[144,128]{1,0:T(1,128)}', space=vmem, size = 0x12000, scoped, tag = 'internal scratch']
  %s0 = inlined_call_operand.vmem [shape: f32[4,32], index: 0, kind: input, shape index: {}]
  %s1 = inlined_call_operand.vmem [shape: f32[32,64], index: 1, kind: input, shape index: {}]
  %s2 = inlined_call_operand.vmem [shape: f32[1,64], index: 2, kind: input, shape index: {}]
  %s3 = inlined_call_operand.vmem [shape: f32[64,32], index: 3, kind: input, shape index: {}]
  %s4 = inlined_call_operand.vmem [shape: f32[1,32], index: 4, kind: input, shape index: {}]
  %s5 = inlined_call_operand.vmem [shape: f32[32,16], index: 5, kind: input, shape index: {}]
  %s6 = inlined_call_operand.vmem [shape: f32[1,16], index: 6, kind: input, shape index: {}]
  %s7 = inlined_call_operand.hbm [shape: f32[4,16], index: 7, kind: output, shape index: {}]
  %s8 = sld [smem:[#allocation0]]
  $region38: #{tpu_custom_call.1} parent=0
    _
  %s10 = ssub.s32 1, %s8
  %s11 = scalar_select 0, %s10, %s8
  $region1: #{tpu_custom_call.1} parent=0
    #allocation2 [shape = 'u8[8192]{0}', space=vmem, size = 0x2000, scoped, tag = 'output window, operand 0, single buffered']
    #allocation3 [shape = 's32[1]{0}', space=sflag, size = 0x4, scoped, tag = 'scoped memory for tpu_custom_call.1']
    %12 = vsyncpa [#allocation3], 0
    // Predicated region
    $region2: #{tpu_custom_call.1} parent=1 // pred_check
      _
    $region3: #{tpu_custom_call.1} parent=1 // pred_check_branch
      %14 = sbr.rel (0) target = $region5
    $region4: #{tpu_custom_call.1} parent=1 // pred_region
      _
    $region5: #{tpu_custom_call.1} parent=1 // pred_fallthru
      _
    // Predicated region
    $region6: #{tpu_custom_call.1} parent=1 // pred_check
      _
    $region7: #{tpu_custom_call.1} parent=1 // pred_check_branch
      %16 = sbr.rel (0) target = $region9
    $region8: #{tpu_custom_call.1} parent=1 // pred_region
      _
    $region9: #{tpu_custom_call.1} parent=1 // pred_fallthru
      _
    // Predicated region
    $region10: #{tpu_custom_call.1} parent=1 // pred_check
      _
    $region11: #{tpu_custom_call.1} parent=1 // pred_check_branch
      %18 = sbr.rel (0) target = $region13
    $region12: #{tpu_custom_call.1} parent=1 // pred_region
      _
    $region13: #{tpu_custom_call.1} parent=1 // pred_fallthru
      _
    // Predicated region
    $region14: #{tpu_custom_call.1} parent=1 // pred_check
      _
    $region15: #{tpu_custom_call.1} parent=1 // pred_check_branch
      %20 = sbr.rel (0) target = $region17
    $region16: #{tpu_custom_call.1} parent=1 // pred_region
      _
    $region17: #{tpu_custom_call.1} parent=1 // pred_fallthru
      _
    // Predicated region
    $region18: #{tpu_custom_call.1} parent=1 // pred_check
      _
    $region19: #{tpu_custom_call.1} parent=1 // pred_check_branch
      %22 = sbr.rel (0) target = $region21
    $region20: #{tpu_custom_call.1} parent=1 // pred_region
      _
    $region21: #{tpu_custom_call.1} parent=1 // pred_fallthru
      _
    // Predicated region
    $region22: #{tpu_custom_call.1} parent=1 // pred_check
      _
    $region23: #{tpu_custom_call.1} parent=1 // pred_check_branch
      %24 = sbr.rel (0) target = $region25
    $region24: #{tpu_custom_call.1} parent=1 // pred_region
      _
    $region25: #{tpu_custom_call.1} parent=1 // pred_fallthru
      _
    // Predicated region
    $region26: #{tpu_custom_call.1} parent=1 // pred_check
      _
    $region27: #{tpu_custom_call.1} parent=1 // pred_check_branch
      %26 = sbr.rel (0) target = $region29
    $region28: #{tpu_custom_call.1} parent=1 // pred_region
      _
    $region29: #{tpu_custom_call.1} parent=1 // pred_fallthru
      _
    %v28 = vld [vmem:[%s0] sm:$0xff]
    %v29 = vld [vmem:[%s0 + $0x8] sm:$0xff]
    %v30 = vpack.c.bf16 %v29, %v28
    %v31 = vld [vmem:[%s1] sm:$0xff]
    %v32 = vld [vmem:[%s1 + $0x8] sm:$0xff]
    %v33 = vld [vmem:[%s1 + $0x10] sm:$0xff]
    %v34 = vld [vmem:[%s1 + $0x18] sm:$0xff]
    %v35 = vpack.c.bf16 %v32, %v31
    %v36 = vpack.c.bf16 %v34, %v33
    %v37 = vld [vmem:[%s2] sm:$0x1]
    %v39 = vlaneseq
    %v40 = vshrl.u32 %v39, 7
    %v41 = vsub.s32 0, %v40
    %v42 = vrot.slane %v37, %v41
    %vm44 = vcmask 261120
    %v46 = vsel %vm44, %v30, 0
    %48 = vmatprep.subr.bf16.mxu0 0
    %49 = vmatpush1.bf16.msra.mxu0 %v35
    %50 = vmatprep.subr.bf16.mxu0 0
    %51 = vmatpush1.bf16.msra.mxu0 %v36
    %52 = vmatprep.subr.bf16.mxu0 0
    %53 = vmatpush1.bf16.msra.mxu0 0
    %54 = vmatprep.subr.bf16.mxu0 0
    %55 = vmatpush1.bf16.msra.mxu0 0
    %56 = vmatprep.subr.bf16.mxu0 0
    %57 = vmatpush1.bf16.msra.mxu0 0
    %58 = vmatprep.subr.bf16.mxu0 0
    %59 = vmatpush1.bf16.msra.mxu0 0
    %60 = vmatprep.subr.bf16.mxu0 0
    %61 = vmatpush1.bf16.msra.mxu0 0
    %62 = vmatprep.subr.bf16.mxu0 0
    %63 = vmatpush1.bf16.msra.mxu0 0
    %64 = vmatprep.subr.bf16.mxu0 0
    %65 = vmatpush1.bf16.msra.mxu0 0
    %66 = vmatprep.subr.bf16.mxu0 0
    %67 = vmatpush1.bf16.msra.mxu0 0
    %68 = vmatprep.subr.bf16.mxu0 0
    %69 = vmatpush1.bf16.msra.mxu0 0
    %70 = vmatprep.subr.bf16.mxu0 0
    %71 = vmatpush1.bf16.msra.mxu0 0
    %72 = vmatprep.subr.bf16.mxu0 0
    %73 = vmatpush1.bf16.msra.mxu0 0
    %74 = vmatprep.subr.bf16.mxu0 0
    %75 = vmatpush1.bf16.msra.mxu0 0
    %76 = vmatprep.subr.bf16.mxu0 0
    %77 = vmatpush1.bf16.msra.mxu0 0
    %78 = vmatprep.subr.bf16.mxu0 0
    %79 = vmatpush1.bf16.msra.mxu0 0
    %80 = vmatprep.mubr.bf16.mxu0 0
    %81 = vmatmul.mubr.bf16.gmra.mrb[0].mxu0 %v46
    %v82 = vpop.f32.mrb[0].mxu0
    %v83 = vadd.f32 %v42, %v82
    %v84 = vpop.f32.mrb[0].mxu0
    %v85 = vpop.f32.mrb[0].mxu0
    %v86 = vadd.f32 %v42, %v85
    %v87 = vpop.f32.mrb[0].mxu0
    %88 = vdwg.mxu0
    %v89 = vmax.f32 %v83, 0.0
    %v90 = vmax.f32 %v86, 0.0
    %v91 = vpack.c.bf16 %v90, %v89
    %v92 = vld [vmem:[%s3] sm:$0xff]
    %v93 = vld [vmem:[%s3 + $0x8] sm:$0xff]
    %v94 = vld [vmem:[%s3 + $0x10] sm:$0xff]
    %v95 = vld [vmem:[%s3 + $0x18] sm:$0xff]
    %v96 = vld [vmem:[%s3 + $0x20] sm:$0xff]
    %v97 = vld [vmem:[%s3 + $0x28] sm:$0xff]
    %v98 = vld [vmem:[%s3 + $0x30] sm:$0xff]
    %v99 = vld [vmem:[%s3 + $0x38] sm:$0xff]
    %v100 = vpack.c.bf16 %v93, %v92
    %v101 = vpack.c.bf16 %v95, %v94
    %v102 = vpack.c.bf16 %v97, %v96
    %v103 = vpack.c.bf16 %v99, %v98
    %v104 = vld [vmem:[%s4] sm:$0x1]
    %v106 = vlaneseq
    %v107 = vshrl.u32 %v106, 7
    %v108 = vsub.s32 0, %v107
    %v109 = vrot.slane %v104, %v108
    %vm111 = vcmask 523264
    %v113 = vsel %vm111, %v91, 0
    %115 = vmatprep.subr.bf16.mxu0 0
    %116 = vmatpush1.bf16.msra.mxu0 %v100
    %117 = vmatprep.subr.bf16.mxu0 0
    %118 = vmatpush1.bf16.msra.mxu0 %v101
    %119 = vmatprep.subr.bf16.mxu0 0
    %120 = vmatpush1.bf16.msra.mxu0 %v102
    %121 = vmatprep.subr.bf16.mxu0 0
    %122 = vmatpush1.bf16.msra.mxu0 %v103
    %123 = vmatprep.subr.bf16.mxu0 0
    %124 = vmatpush1.bf16.msra.mxu0 0
    %125 = vmatprep.subr.bf16.mxu0 0
    %126 = vmatpush1.bf16.msra.mxu0 0
    %127 = vmatprep.subr.bf16.mxu0 0
    %128 = vmatpush1.bf16.msra.mxu0 0
    %129 = vmatprep.subr.bf16.mxu0 0
    %130 = vmatpush1.bf16.msra.mxu0 0
    %131 = vmatprep.subr.bf16.mxu0 0
    %132 = vmatpush1.bf16.msra.mxu0 0
    %133 = vmatprep.subr.bf16.mxu0 0
    %134 = vmatpush1.bf16.msra.mxu0 0
    %135 = vmatprep.subr.bf16.mxu0 0
    %136 = vmatpush1.bf16.msra.mxu0 0
    %137 = vmatprep.subr.bf16.mxu0 0
    %138 = vmatpush1.bf16.msra.mxu0 0
    %139 = vmatprep.subr.bf16.mxu0 0
    %140 = vmatpush1.bf16.msra.mxu0 0
    %141 = vmatprep.subr.bf16.mxu0 0
    %142 = vmatpush1.bf16.msra.mxu0 0
    %143 = vmatprep.subr.bf16.mxu0 0
    %144 = vmatpush1.bf16.msra.mxu0 0
    %145 = vmatprep.subr.bf16.mxu0 0
    %146 = vmatpush1.bf16.msra.mxu0 0
    %147 = vmatprep.mubr.bf16.mxu0 0
    %148 = vmatmul.mubr.bf16.gmra.mrb[0].mxu0 %v113
    %v149 = vpop.f32.mrb[0].mxu0
    %v150 = vadd.f32 %v109, %v149
    %v151 = vpop.f32.mrb[0].mxu0
    %v152 = vpop.f32.mrb[0].mxu0
    %v153 = vadd.f32 %v109, %v152
    %v154 = vpop.f32.mrb[0].mxu0
    %155 = vdwg.mxu0
    %v156 = vmax.f32 %v150, 0.0
    %v157 = vmax.f32 %v153, 0.0
    %v158 = vpack.c.bf16 %v157, %v156
    %v159 = vld [vmem:[%s5] sm:$0xff]
    %v160 = vld [vmem:[%s5 + $0x8] sm:$0xff]
    %v161 = vld [vmem:[%s5 + $0x10] sm:$0xff]
    %v162 = vld [vmem:[%s5 + $0x18] sm:$0xff]
    %v163 = vpack.c.bf16 %v160, %v159
    %v164 = vpack.c.bf16 %v162, %v161
    %v165 = vld [vmem:[%s6] sm:$0x1]
    %v167 = vlaneseq
    %v168 = vshrl.u32 %v167, 7
    %v169 = vsub.s32 0, %v168
    %v170 = vrot.slane %v165, %v169
    %v173 = vsel %vm44, %v158, 0
    %175 = vmatprep.subr.bf16.mxu0 0
    %176 = vmatpush1.bf16.msra.mxu0 %v163
    %177 = vmatprep.subr.bf16.mxu0 0
    %178 = vmatpush1.bf16.msra.mxu0 %v164
    %179 = vmatprep.subr.bf16.mxu0 0
    %180 = vmatpush1.bf16.msra.mxu0 0
    %181 = vmatprep.subr.bf16.mxu0 0
    %182 = vmatpush1.bf16.msra.mxu0 0
    %183 = vmatprep.subr.bf16.mxu0 0
    %184 = vmatpush1.bf16.msra.mxu0 0
    %185 = vmatprep.subr.bf16.mxu0 0
    %186 = vmatpush1.bf16.msra.mxu0 0
    %187 = vmatprep.subr.bf16.mxu0 0
    %188 = vmatpush1.bf16.msra.mxu0 0
    %189 = vmatprep.subr.bf16.mxu0 0
    %190 = vmatpush1.bf16.msra.mxu0 0
    %191 = vmatprep.subr.bf16.mxu0 0
    %192 = vmatpush1.bf16.msra.mxu0 0
    %193 = vmatprep.subr.bf16.mxu0 0
    %194 = vmatpush1.bf16.msra.mxu0 0
    %195 = vmatprep.subr.bf16.mxu0 0
    %196 = vmatpush1.bf16.msra.mxu0 0
    %197 = vmatprep.subr.bf16.mxu0 0
    %198 = vmatpush1.bf16.msra.mxu0 0
    %199 = vmatprep.subr.bf16.mxu0 0
    %200 = vmatpush1.bf16.msra.mxu0 0
    %201 = vmatprep.subr.bf16.mxu0 0
    %202 = vmatpush1.bf16.msra.mxu0 0
    %203 = vmatprep.subr.bf16.mxu0 0
    %204 = vmatpush1.bf16.msra.mxu0 0
    %205 = vmatprep.subr.bf16.mxu0 0
    %206 = vmatpush1.bf16.msra.mxu0 0
    %207 = vmatprep.mubr.bf16.mxu0 0
    %208 = vmatmul.mubr.bf16.gmra.mrb[0].mxu0 %v173
    %v209 = vpop.f32.mrb[0].mxu0
    %v210 = vadd.f32 %v170, %v209
    %v211 = vpop.f32.mrb[0].mxu0
    %v212 = vpop.f32.mrb[0].mxu0
    %v213 = vadd.f32 %v170, %v212
    %v214 = vpop.f32.mrb[0].mxu0
    %215 = vdwg.mxu0
    %vm216 = vcmask 130048
    %217 = vst.msk [vmem:[#allocation2] sm:$0xff] %vm216, %v210
    %218 = vst.msk [vmem:[#allocation2 + $0x8] sm:$0xff] %vm216, %v213
    // Predicated region
    $region30: #{tpu_custom_call.1} parent=1 // pred_check
      _
    $region31: #{tpu_custom_call.1} parent=1 // pred_check_branch
      %220 = sbr.rel (0) target = $region33
    $region32: #{tpu_custom_call.1} parent=1 // pred_region
      %s222 = ssub.s32 256, 64
      %223 = vsyncadd [#allocation3], %s222
      %s224 = sshll.u32 [#allocation2], 4
      %s225 = int_to_ptr.vmem [resolvable:$true] %s224
      %230 = dma.vmem_to_hbm [thread:$0]  %s225, 64, %s7, [#allocation3], 64, 64, 4
    $region33: #{tpu_custom_call.1} parent=1 // pred_fallthru
      _
    // Predicated region
    $region34: #{tpu_custom_call.1} parent=1 // pred_check
      _
    $region35: #{tpu_custom_call.1} parent=1 // pred_check_branch
      %232 = sbr.rel (0) target = $region37
    $region36: #{tpu_custom_call.1} parent=1 // pred_region
      %233 = dma.done [#allocation3], 256
    $region37: #{tpu_custom_call.1} parent=1 // pred_fallthru
      _
    %234 = vsyncpa [#allocation3], 1

</llo_original>
